<compile_context>
chip_gen: v7x
topology: tpu7x:2x2x1
jax: 0.10.0
libtpu: 0.0.40
codegen_flags: <defaults>
</compile_context>

<pallas_src>
import functools

import jax
import jax.numpy as jnp
from jax.experimental import pallas as pl
from jax.experimental.pallas import tpu as pltpu


def _round_up(x, m):
    return ((x + m - 1) // m) * m


def _box_predictor_kernel(x_ref, w1_ref, b1_ref, w2c_ref, b2c_ref,
                          w2b_ref, b2b_ref, scores_ref, bbox_ref, *, hidden):
    """Fused Linear -> ReLU -> (2x) Linear for one N-block of RoIs."""
    x = x_ref[...].astype(w1_ref.dtype)                         # (bn, Cp) bf16

    # Fused first layer for both heads: one wide MXU pass.
    h = jnp.dot(x, w1_ref[...], preferred_element_type=jnp.float32) + b1_ref[...]
    h = jnp.maximum(h, 0.0).astype(x.dtype)                      # (bn, 2*Cp) bf16

    h_c = h[:, :hidden]                                          # 128-aligned slices
    h_b = h[:, hidden:]

    scores = jnp.dot(h_c, w2c_ref[...], preferred_element_type=jnp.float32) + b2c_ref[...]
    bbox = jnp.dot(h_b, w2b_ref[...], preferred_element_type=jnp.float32) + b2b_ref[...]

    scores_ref[...] = scores.astype(scores_ref.dtype)            # lane-dense stores
    bbox_ref[...] = bbox.astype(bbox_ref.dtype)


def prepare_box_predictor_params(params, *, compute_dtype=jnp.bfloat16):
    """One-time packing of BoxPredictor weights for the Pallas kernel.

    Fuses the two first-layer weights into one (Cp, 2*Cp) matrix, zero-pads
    every lane dim to a multiple of 128 and casts weights to compute_dtype.
    Call once outside the forward path and reuse (packed, meta)."""
    c = params["w1c"].shape[0]
    num_classes = params["w2c"].shape[1]
    n_bbox = num_classes * 4

    cp = _round_up(c, 128)            # feature / hidden lanes
    pc = _round_up(num_classes, 128)  # cls output lanes
    pb = _round_up(n_bbox, 128)       # bbox output lanes

    # Fused first-layer weight: cls head in cols [0, cp), bbox head in [cp, 2cp).
    # Padded rows/cols and padded bias stay exactly zero, so ReLU(0)=0
    # contributes nothing to the second-layer matmuls (keep this invariant).
    w1 = jnp.zeros((cp, 2 * cp), compute_dtype)
    w1 = w1.at[:c, :c].set(params["w1c"].astype(compute_dtype))
    w1 = w1.at[:c, cp:cp + c].set(params["w1b"].astype(compute_dtype))
    b1 = jnp.zeros((1, 2 * cp), jnp.float32)
    b1 = b1.at[:, :c].set(params["b1c"].reshape(1, -1))
    b1 = b1.at[:, cp:cp + c].set(params["b1b"].reshape(1, -1))

    w2c = jnp.zeros((cp, pc), compute_dtype).at[:c, :num_classes].set(
        params["w2c"].astype(compute_dtype))
    b2c = jnp.zeros((1, pc), jnp.float32).at[:, :num_classes].set(
        params["b2c"].reshape(1, -1))
    w2b = jnp.zeros((cp, pb), compute_dtype).at[:c, :n_bbox].set(
        params["w2b"].astype(compute_dtype))
    b2b = jnp.zeros((1, pb), jnp.float32).at[:, :n_bbox].set(
        params["b2b"].reshape(1, -1))

    packed = dict(w1=w1, b1=b1, w2c=w2c, b2c=b2c, w2b=w2b, b2b=b2b)
    packed = jax.tree_util.tree_map(jax.block_until_ready, packed)  # materialize once
    meta = dict(c=c, cp=cp, num_classes=num_classes, pc=pc,
                n_bbox=n_bbox, pb=pb, compute_dtype=compute_dtype)
    return packed, meta


def _choose_block_n(n, block_n):
    """RoI block size: multiple of 16 (bf16 sublane tile), >=4 grid steps when
    N allows (v7x megacore balance), and small zero-row padding waste."""
    n = max(int(n), 1)
    steps = max(1, -(-n // block_n))            # cdiv(n, block_n)
    if n >= 64:
        steps = max(steps, 4)                   # keep both v7x TensorCores busy
    steps = min(steps, -(-n // 16))             # keep bn >= 16
    bn = _round_up(-(-n // steps), 16)
    n_pad = _round_up(n, bn)
    return bn, n_pad


def _vmem_limit_bytes(needed_bytes):
    try:
        cap = int(pltpu.get_tpu_info().vmem_capacity_bytes)
    except Exception:
        cap = 64 * 1024 * 1024                  # conservative (v7x per-TC VMEM)
    ceiling = (cap * 3) // 4                    # headroom for Mosaic scratch/sems
    return int(min(max(needed_bytes, 32 * 1024 * 1024), ceiling))


def box_predictor_forward(x, packed, meta, *, block_n=512):
    """BoxPredictor forward using pre-packed params.

    Returns (scores, bbox_deltas): (N, num_classes), (N, 4*num_classes)."""
    if x.ndim == 4:
        assert x.shape[2] == 1 and x.shape[3] == 1, "spatial dims must be [1, 1]"
    x2d = x.reshape(x.shape[0], -1)

    n, c = x2d.shape
    assert c == meta["c"], "feature dim mismatch with packed params"
    cp, pc, pb = meta["cp"], meta["pc"], meta["pb"]
    num_classes, n_bbox = meta["num_classes"], meta["n_bbox"]
    compute_dtype = meta["compute_dtype"]

    bn, n_pad = _choose_block_n(n, block_n)

    # Only materialize a padded copy of x when unavoidable; otherwise stream the
    # caller's array directly and cast to bf16 inside the kernel (no extra pass).
    if (c != cp) or (n != n_pad):
        x_in = jnp.zeros((n_pad, cp), compute_dtype).at[:n, :c].set(
            x2d.astype(compute_dtype))
    else:
        x_in = x2d

    w1, b1 = packed["w1"], packed["b1"]
    w2c, b2c = packed["w2c"], packed["b2c"]
    w2b, b2b = packed["w2b"], packed["b2b"]

    # --- VMEM budget: single-buffered resident weights + double-buffered tiles.
    weight_bytes = (w1.size + w2c.size + w2b.size) * w1.dtype.itemsize \
        + (b1.size + b2c.size + b2b.size) * 4
    x_itemsize = jnp.dtype(x_in.dtype).itemsize
    stream_bytes = 2 * (bn * cp * x_itemsize + bn * (pc + pb) * 4)
    scratch_bytes = bn * 2 * cp * 4 + bn * (pc + pb) * 4
    needed = 2 * weight_bytes + stream_bytes + scratch_bytes     # 2x margin on weights
    vmem_budget = _vmem_limit_bytes(needed)
    # TODO(synk): for cp >= ~2048 the resident-w1 strategy no longer fits v7x
    # VMEM; add a K-tiled reduction grid axis (f32 acc scratch + pl.when
    # init/finalize) for that regime instead of forcing resident weights.

    flops = 2 * n_pad * cp * (2 * cp) + 2 * n_pad * cp * (pc + pb)
    bytes_accessed = x_in.size * x_itemsize + weight_bytes + n_pad * (pc + pb) * 4
    cost = pl.CostEstimate(flops=flops, transcendentals=0,
                           bytes_accessed=bytes_accessed)

    out_shape = (
        jax.ShapeDtypeStruct((n_pad, pc), jnp.float32),
        jax.ShapeDtypeStruct((n_pad, pb), jnp.float32),
    )
    out_specs = (
        pl.BlockSpec((bn, pc), lambda i: (i, 0)),
        pl.BlockSpec((bn, pb), lambda i: (i, 0)),
    )

    def run(single_buffer_weights):
        # Weights/biases never change across grid steps; single-buffer them so
        # the second pipeline buffer does not waste VMEM (halves w1 footprint).
        rkw = dict(pipeline_mode=pl.Buffered(1)) if single_buffer_weights else {}
        in_specs = [
            pl.BlockSpec((bn, cp), lambda i: (i, 0)),            # x: streamed
            pl.BlockSpec((cp, 2 * cp), lambda i: (0, 0), **rkw), # resident weights
            pl.BlockSpec((1, 2 * cp), lambda i: (0, 0), **rkw),
            pl.BlockSpec((cp, pc), lambda i: (0, 0), **rkw),
            pl.BlockSpec((1, pc), lambda i: (0, 0), **rkw),
            pl.BlockSpec((cp, pb), lambda i: (0, 0), **rkw),
            pl.BlockSpec((1, pb), lambda i: (0, 0), **rkw),
        ]
        grid_spec = pltpu.PrefetchScalarGridSpec(
            num_scalar_prefetch=0,
            grid=(n_pad // bn,),
            in_specs=in_specs,
            out_specs=out_specs,
        )
        return pl.pallas_call(
            functools.partial(_box_predictor_kernel, hidden=cp),
            out_shape=out_shape,
            grid_spec=grid_spec,
            compiler_params=pltpu.CompilerParams(
                dimension_semantics=("parallel",),
                vmem_limit_bytes=vmem_budget,
            ),
            cost_estimate=cost,
        )(x_in, w1, b1, w2c, b2c, w2b, b2b)

    try:
        scores_pad, bbox_pad = run(single_buffer_weights=True)
    except Exception:  # fall back if this jax build rejects Buffered(1) specs
        scores_pad, bbox_pad = run(single_buffer_weights=False)

    # Strip padding back to the module's logical output shapes.
    return scores_pad[:n, :num_classes], bbox_pad[:n, :n_bbox]


def init_params(key, in_channels, num_classes):
    """Parameter init mirroring the PyTorch module's shapes.

    Weights are stored as (in_features, out_features); biases as (1, out)."""
    ks = jax.random.split(key, 8)

    def lin(kw, kb, fan_in, fan_out):
        bound = 1.0 / jnp.sqrt(fan_in)
        w = jax.random.uniform(kw, (fan_in, fan_out), jnp.float32, -bound, bound)
        b = jax.random.uniform(kb, (1, fan_out), jnp.float32, -bound, bound)
        return w, b

    w1c, b1c = lin(ks[0], ks[1], in_channels, in_channels)
    w2c, b2c = lin(ks[2], ks[3], in_channels, num_classes)
    w1b, b1b = lin(ks[4], ks[5], in_channels, in_channels)
    w2b, b2b = lin(ks[6], ks[7], in_channels, num_classes * 4)
    return dict(w1c=w1c, b1c=b1c, w2c=w2c, b2c=b2c,
                w1b=w1b, b1b=b1b, w2b=w2b, b2b=b2b)


def _reference_forward(x, params, compute_dtype=jnp.bfloat16):
    """Pure-JAX reference mirroring the kernel's bf16 rounding of inputs."""
    def r(a):  # bf16 round-trip (matches MXU bf16 inputs, f32 accumulate)
        return a.astype(compute_dtype).astype(jnp.float32)

    x2d = r(x.reshape(x.shape[0], -1))
    h_c = r(jnp.maximum(x2d @ r(params["w1c"]) + params["b1c"], 0.0))
    scores = h_c @ r(params["w2c"]) + params["b2c"]
    h_b = r(jnp.maximum(x2d @ r(params["w1b"]) + params["b1b"], 0.0))
    bbox = h_b @ r(params["w2b"]) + params["b2b"]
    return scores, bbox


if __name__ == "__main__":
    key = jax.random.PRNGKey(0)
    k_x, k_p = jax.random.split(key)

    batch = 8
    in_channels = 32
    num_classes = 5

    # Input as NCHW with 1x1 spatial, like RoI-pooled features fed to the head.
    x = jax.random.normal(k_x, (batch, in_channels, 1, 1), dtype=jnp.float32)
    params = init_params(k_p, in_channels, num_classes)

    # One-time packing (hoisted out of the per-call forward path).
    packed, meta = prepare_box_predictor_params(params)

    scores, bbox = box_predictor_forward(x, packed, meta)
    scores = jax.block_until_ready(scores)
    bbox = jax.block_until_ready(bbox)

    ref_scores, ref_bbox = _reference_forward(x, params)
    assert scores.shape == (batch, num_classes)
    assert bbox.shape == (batch, num_classes * 4)
    assert jnp.allclose(scores, ref_scores, atol=2e-3, rtol=2e-3)
    assert jnp.allclose(bbox, ref_bbox, atol=2e-3, rtol=2e-3)

    print("KERNEL_OK")
</pallas_src>

<mosaic_0001>
module attributes {stable_mosaic.version = 11 : i64} {
  func.func @_box_predictor_kernel(%arg0: i32, %arg1: memref<16x128xbf16, #tpu.memory_space<vmem>>, %arg2: memref<128x256xbf16, #tpu.memory_space<vmem>>, %arg3: memref<1x256xf32, #tpu.memory_space<vmem>>, %arg4: memref<128x128xbf16, #tpu.memory_space<vmem>>, %arg5: memref<1x128xf32, #tpu.memory_space<vmem>>, %arg6: memref<128x128xbf16, #tpu.memory_space<vmem>>, %arg7: memref<1x128xf32, #tpu.memory_space<vmem>>, %arg8: memref<16x128xf32, #tpu.memory_space<vmem>>, %arg9: memref<16x128xf32, #tpu.memory_space<vmem>>) attributes {dimension_semantics = [#tpu.dimension_semantics<parallel>], iteration_bounds = array<i64: 1>, scalar_prefetch = 0 : i64, scratch_operands = 0 : i64, tpu.core_type = #tpu.core_type<tc>, window_params = [{transform_indices = @transform_0, window_bounds = array<i64: 16, 128>}, {pipeline_mode = #tpu.pipeline_mode<synchronous>, transform_indices = @transform_1, window_bounds = array<i64: 128, 256>}, {pipeline_mode = #tpu.pipeline_mode<synchronous>, transform_indices = @transform_2, window_bounds = array<i64: 1, 256>}, {pipeline_mode = #tpu.pipeline_mode<synchronous>, transform_indices = @transform_3, window_bounds = array<i64: 128, 128>}, {pipeline_mode = #tpu.pipeline_mode<synchronous>, transform_indices = @transform_4, window_bounds = array<i64: 1, 128>}, {pipeline_mode = #tpu.pipeline_mode<synchronous>, transform_indices = @transform_5, window_bounds = array<i64: 128, 128>}, {pipeline_mode = #tpu.pipeline_mode<synchronous>, transform_indices = @transform_6, window_bounds = array<i64: 1, 128>}, {transform_indices = @transform_7, window_bounds = array<i64: 16, 128>}, {transform_indices = @transform_8, window_bounds = array<i64: 16, 128>}]} {
    %c0 = arith.constant 0 : index
    %c0_0 = arith.constant 0 : index
    %0 = vector.load %arg1[%c0, %c0_0] : memref<16x128xbf16, #tpu.memory_space<vmem>>, vector<16x128xbf16>
    %c0_1 = arith.constant 0 : index
    %c0_2 = arith.constant 0 : index
    %1 = vector.load %arg2[%c0_1, %c0_2] : memref<128x256xbf16, #tpu.memory_space<vmem>>, vector<128x256xbf16>
    %cst = arith.constant dense<0.000000e+00> : vector<16x256xf32>
    %2 = tpu.matmul %0, %1, %cst {dimension_numbers = #tpu.dot_dimension_numbers<[1], [0], [0], [1], [0, 0, 1, 1], [], []>} : vector<16x128xbf16>, vector<128x256xbf16>, vector<16x256xf32> -> vector<16x256xf32>
    %c0_3 = arith.constant 0 : index
    %c0_4 = arith.constant 0 : index
    %3 = vector.load %arg3[%c0_3, %c0_4] : memref<1x256xf32, #tpu.memory_space<vmem>>, vector<1x256xf32>
    %4 = vector.broadcast %3 : vector<1x256xf32> to vector<16x256xf32>
    %5 = arith.addf %2, %4 : vector<16x256xf32>
    %cst_5 = arith.constant 0.000000e+00 : f32
    %6 = vector.broadcast %cst_5 : f32 to vector<16x256xf32>
    %7 = arith.maximumf %5, %6 : vector<16x256xf32>
    %8 = arith.truncf %7 : vector<16x256xf32> to vector<16x256xbf16>
    %9 = vector.extract_strided_slice %8 {offsets = [0, 0], sizes = [16, 128], strides = [1, 1]} : vector<16x256xbf16> to vector<16x128xbf16>
    %10 = vector.extract_strided_slice %8 {offsets = [0, 128], sizes = [16, 128], strides = [1, 1]} : vector<16x256xbf16> to vector<16x128xbf16>
    %c0_6 = arith.constant 0 : index
    %c0_7 = arith.constant 0 : index
    %11 = vector.load %arg4[%c0_6, %c0_7] : memref<128x128xbf16, #tpu.memory_space<vmem>>, vector<128x128xbf16>
    %cst_8 = arith.constant dense<0.000000e+00> : vector<16x128xf32>
    %12 = tpu.matmul %9, %11, %cst_8 {dimension_numbers = #tpu.dot_dimension_numbers<[1], [0], [0], [1], [0, 0, 1, 1], [], []>} : vector<16x128xbf16>, vector<128x128xbf16>, vector<16x128xf32> -> vector<16x128xf32>
    %c0_9 = arith.constant 0 : index
    %c0_10 = arith.constant 0 : index
    %13 = vector.load %arg5[%c0_9, %c0_10] : memref<1x128xf32, #tpu.memory_space<vmem>>, vector<1x128xf32>
    %14 = vector.broadcast %13 : vector<1x128xf32> to vector<16x128xf32>
    %15 = arith.addf %12, %14 : vector<16x128xf32>
    %c0_11 = arith.constant 0 : index
    %c0_12 = arith.constant 0 : index
    %16 = vector.load %arg6[%c0_11, %c0_12] : memref<128x128xbf16, #tpu.memory_space<vmem>>, vector<128x128xbf16>
    %cst_13 = arith.constant dense<0.000000e+00> : vector<16x128xf32>
    %17 = tpu.matmul %10, %16, %cst_13 {dimension_numbers = #tpu.dot_dimension_numbers<[1], [0], [0], [1], [0, 0, 1, 1], [], []>} : vector<16x128xbf16>, vector<128x128xbf16>, vector<16x128xf32> -> vector<16x128xf32>
    %c0_14 = arith.constant 0 : index
    %c0_15 = arith.constant 0 : index
    %18 = vector.load %arg7[%c0_14, %c0_15] : memref<1x128xf32, #tpu.memory_space<vmem>>, vector<1x128xf32>
    %19 = vector.broadcast %18 : vector<1x128xf32> to vector<16x128xf32>
    %20 = arith.addf %17, %19 : vector<16x128xf32>
    %c0_16 = arith.constant 0 : index
    %c0_17 = arith.constant 0 : index
    %21 = vector.load %arg8[%c0_16, %c0_17] : memref<16x128xf32, #tpu.memory_space<vmem>>, vector<16x128xf32>
    tpu.vector_store %arg8[%c0_16, %c0_17], %15 {strides = array<i32>} : memref<16x128xf32, #tpu.memory_space<vmem>>, vector<16x128xf32>,
    %c0_18 = arith.constant 0 : index
    %c0_19 = arith.constant 0 : index
    %22 = vector.load %arg9[%c0_18, %c0_19] : memref<16x128xf32, #tpu.memory_space<vmem>>, vector<16x128xf32>
    tpu.vector_store %arg9[%c0_18, %c0_19], %20 {strides = array<i32>} : memref<16x128xf32, #tpu.memory_space<vmem>>, vector<16x128xf32>,
    return
  }
  func.func @transform_0(%arg0: i32) -> (i32, i32) {
    %c0_i32 = arith.constant 0 : i32
    %c0_i32_0 = arith.constant 0 : i32
    return %arg0, %c0_i32 : i32, i32
  }
  func.func @transform_1(%arg0: i32) -> (i32, i32) {
    %c0_i32 = arith.constant 0 : i32
    %c0_i32_0 = arith.constant 0 : i32
    %c0_i32_1 = arith.constant 0 : i32
    return %c0_i32, %c0_i32_0 : i32, i32
  }
  func.func @transform_2(%arg0: i32) -> (i32, i32) {
    %c0_i32 = arith.constant 0 : i32
    %c0_i32_0 = arith.constant 0 : i32
    %c0_i32_1 = arith.constant 0 : i32
    return %c0_i32, %c0_i32_0 : i32, i32
  }
  func.func @transform_3(%arg0: i32) -> (i32, i32) {
    %c0_i32 = arith.constant 0 : i32
    %c0_i32_0 = arith.constant 0 : i32
    %c0_i32_1 = arith.constant 0 : i32
    return %c0_i32, %c0_i32_0 : i32, i32
  }
  func.func @transform_4(%arg0: i32) -> (i32, i32) {
    %c0_i32 = arith.constant 0 : i32
    %c0_i32_0 = arith.constant 0 : i32
    %c0_i32_1 = arith.constant 0 : i32
    return %c0_i32, %c0_i32_0 : i32, i32
  }
  func.func @transform_5(%arg0: i32) -> (i32, i32) {
    %c0_i32 = arith.constant 0 : i32
    %c0_i32_0 = arith.constant 0 : i32
    %c0_i32_1 = arith.constant 0 : i32
    return %c0_i32, %c0_i32_0 : i32, i32
  }
  func.func @transform_6(%arg0: i32) -> (i32, i32) {
    %c0_i32 = arith.constant 0 : i32
    %c0_i32_0 = arith.constant 0 : i32
    %c0_i32_1 = arith.constant 0 : i32
    return %c0_i32, %c0_i32_0 : i32, i32
  }
  func.func @transform_7(%arg0: i32) -> (i32, i32) {
    %c0_i32 = arith.constant 0 : i32
    %c0_i32_0 = arith.constant 0 : i32
    return %arg0, %c0_i32 : i32, i32
  }
  func.func @transform_8(%arg0: i32) -> (i32, i32) {
    %c0_i32 = arith.constant 0 : i32
    %c0_i32_0 = arith.constant 0 : i32
    return %arg0, %c0_i32 : i32, i32
  }
}

module attributes {stable_mosaic.version = 11 : i64} {
  func.func @_box_predictor_kernel(%arg0: i32, %arg1: memref<16x128xbf16, #tpu.memory_space<vmem>>, %arg2: memref<128x256xbf16, #tpu.memory_space<vmem>>, %arg3: memref<1x256xf32, #tpu.memory_space<vmem>>, %arg4: memref<128x128xbf16, #tpu.memory_space<vmem>>, %arg5: memref<1x128xf32, #tpu.memory_space<vmem>>, %arg6: memref<128x128xbf16, #tpu.memory_space<vmem>>, %arg7: memref<1x128xf32, #tpu.memory_space<vmem>>, %arg8: memref<16x128xf32, #tpu.memory_space<vmem>>, %arg9: memref<16x128xf32, #tpu.memory_space<vmem>>) attributes {dimension_semantics = [#tpu.dimension_semantics<parallel>], iteration_bounds = array<i64: 1>, scalar_prefetch = 0 : i64, scratch_operands = 0 : i64, tpu.core_type = #tpu.core_type<tc>, window_params = [{transform_indices = @transform_0, window_bounds = array<i64: 16, 128>}, {pipeline_mode = #tpu.pipeline_mode<synchronous>, transform_indices = @transform_1, window_bounds = array<i64: 128, 256>}, {pipeline_mode = #tpu.pipeline_mode<synchronous>, transform_indices = @transform_2, window_bounds = array<i64: 1, 256>}, {pipeline_mode = #tpu.pipeline_mode<synchronous>, transform_indices = @transform_3, window_bounds = array<i64: 128, 128>}, {pipeline_mode = #tpu.pipeline_mode<synchronous>, transform_indices = @transform_4, window_bounds = array<i64: 1, 128>}, {pipeline_mode = #tpu.pipeline_mode<synchronous>, transform_indices = @transform_5, window_bounds = array<i64: 128, 128>}, {pipeline_mode = #tpu.pipeline_mode<synchronous>, transform_indices = @transform_6, window_bounds = array<i64: 1, 128>}, {transform_indices = @transform_7, window_bounds = array<i64: 16, 128>}, {transform_indices = @transform_8, window_bounds = array<i64: 16, 128>}]} {
    %c0 = arith.constant 0 : index
    %c0_0 = arith.constant 0 : index
    %0 = vector.load %arg1[%c0, %c0_0] : memref<16x128xbf16, #tpu.memory_space<vmem>>, vector<16x128xbf16>
    %c0_1 = arith.constant 0 : index
    %c0_2 = arith.constant 0 : index
    %1 = vector.load %arg2[%c0_1, %c0_2] : memref<128x256xbf16, #tpu.memory_space<vmem>>, vector<128x256xbf16>
    %cst = arith.constant dense<0.000000e+00> : vector<16x256xf32>
    %2 = tpu.matmul %0, %1, %cst {dimension_numbers = #tpu.dot_dimension_numbers<[1], [0], [0], [1], [0, 0, 1, 1], [], []>} : vector<16x128xbf16>, vector<128x256xbf16>, vector<16x256xf32> -> vector<16x256xf32>
    %c0_3 = arith.constant 0 : index
    %c0_4 = arith.constant 0 : index
    %3 = vector.load %arg3[%c0_3, %c0_4] : memref<1x256xf32, #tpu.memory_space<vmem>>, vector<1x256xf32>
    %4 = vector.broadcast %3 : vector<1x256xf32> to vector<16x256xf32>
    %5 = arith.addf %2, %4 : vector<16x256xf32>
    %cst_5 = arith.constant 0.000000e+00 : f32
    %6 = vector.broadcast %cst_5 : f32 to vector<16x256xf32>
    %7 = arith.maximumf %5, %6 : vector<16x256xf32>
    %8 = arith.truncf %7 : vector<16x256xf32> to vector<16x256xbf16>
    %9 = vector.extract_strided_slice %8 {offsets = [0, 0], sizes = [16, 128], strides = [1, 1]} : vector<16x256xbf16> to vector<16x128xbf16>
    %10 = vector.extract_strided_slice %8 {offsets = [0, 128], sizes = [16, 128], strides = [1, 1]} : vector<16x256xbf16> to vector<16x128xbf16>
    %c0_6 = arith.constant 0 : index
    %c0_7 = arith.constant 0 : index
    %11 = vector.load %arg4[%c0_6, %c0_7] : memref<128x128xbf16, #tpu.memory_space<vmem>>, vector<128x128xbf16>
    %cst_8 = arith.constant dense<0.000000e+00> : vector<16x128xf32>
    %12 = tpu.matmul %9, %11, %cst_8 {dimension_numbers = #tpu.dot_dimension_numbers<[1], [0], [0], [1], [0, 0, 1, 1], [], []>} : vector<16x128xbf16>, vector<128x128xbf16>, vector<16x128xf32> -> vector<16x128xf32>
    %c0_9 = arith.constant 0 : index
    %c0_10 = arith.constant 0 : index
    %13 = vector.load %arg5[%c0_9, %c0_10] : memref<1x128xf32, #tpu.memory_space<vmem>>, vector<1x128xf32>
    %14 = vector.broadcast %13 : vector<1x128xf32> to vector<16x128xf32>
    %15 = arith.addf %12, %14 : vector<16x128xf32>
    %c0_11 = arith.constant 0 : index
    %c0_12 = arith.constant 0 : index
    %16 = vector.load %arg6[%c0_11, %c0_12] : memref<128x128xbf16, #tpu.memory_space<vmem>>, vector<128x128xbf16>
    %cst_13 = arith.constant dense<0.000000e+00> : vector<16x128xf32>
    %17 = tpu.matmul %10, %16, %cst_13 {dimension_numbers = #tpu.dot_dimension_numbers<[1], [0], [0], [1], [0, 0, 1, 1], [], []>} : vector<16x128xbf16>, vector<128x128xbf16>, vector<16x128xf32> -> vector<16x128xf32>
    %c0_14 = arith.constant 0 : index
    %c0_15 = arith.constant 0 : index
    %18 = vector.load %arg7[%c0_14, %c0_15] : memref<1x128xf32, #tpu.memory_space<vmem>>, vector<1x128xf32>
    %19 = vector.broadcast %18 : vector<1x128xf32> to vector<16x128xf32>
    %20 = arith.addf %17, %19 : vector<16x128xf32>
    %c0_16 = arith.constant 0 : index
    %c0_17 = arith.constant 0 : index
    %21 = vector.load %arg8[%c0_16, %c0_17] : memref<16x128xf32, #tpu.memory_space<vmem>>, vector<16x128xf32>
    tpu.vector_store %arg8[%c0_16, %c0_17], %15 {strides = array<i32>} : memref<16x128xf32, #tpu.memory_space<vmem>>, vector<16x128xf32>,
    %c0_18 = arith.constant 0 : index
    %c0_19 = arith.constant 0 : index
    %22 = vector.load %arg9[%c0_18, %c0_19] : memref<16x128xf32, #tpu.memory_space<vmem>>, vector<16x128xf32>
    tpu.vector_store %arg9[%c0_18, %c0_19], %20 {strides = array<i32>} : memref<16x128xf32, #tpu.memory_space<vmem>>, vector<16x128xf32>,
    return
  }
  func.func @transform_0(%arg0: i32) -> (i32, i32) {
    %c0_i32 = arith.constant 0 : i32
    %c0_i32_0 = arith.constant 0 : i32
    return %arg0, %c0_i32 : i32, i32
  }
  func.func @transform_1(%arg0: i32) -> (i32, i32) {
    %c0_i32 = arith.constant 0 : i32
    %c0_i32_0 = arith.constant 0 : i32
    %c0_i32_1 = arith.constant 0 : i32
    return %c0_i32, %c0_i32_0 : i32, i32
  }
  func.func @transform_2(%arg0: i32) -> (i32, i32) {
    %c0_i32 = arith.constant 0 : i32
    %c0_i32_0 = arith.constant 0 : i32
    %c0_i32_1 = arith.constant 0 : i32
    return %c0_i32, %c0_i32_0 : i32, i32
  }
  func.func @transform_3(%arg0: i32) -> (i32, i32) {
    %c0_i32 = arith.constant 0 : i32
    %c0_i32_0 = arith.constant 0 : i32
    %c0_i32_1 = arith.constant 0 : i32
    return %c0_i32, %c0_i32_0 : i32, i32
  }
  func.func @transform_4(%arg0: i32) -> (i32, i32) {
    %c0_i32 = arith.constant 0 : i32
    %c0_i32_0 = arith.constant 0 : i32
    %c0_i32_1 = arith.constant 0 : i32
    return %c0_i32, %c0_i32_0 : i32, i32
  }
  func.func @transform_5(%arg0: i32) -> (i32, i32) {
    %c0_i32 = arith.constant 0 : i32
    %c0_i32_0 = arith.constant 0 : i32
    %c0_i32_1 = arith.constant 0 : i32
    return %c0_i32, %c0_i32_0 : i32, i32
  }
  func.func @transform_6(%arg0: i32) -> (i32, i32) {
    %c0_i32 = arith.constant 0 : i32
    %c0_i32_0 = arith.constant 0 : i32
    %c0_i32_1 = arith.constant 0 : i32
    return %c0_i32, %c0_i32_0 : i32, i32
  }
  func.func @transform_7(%arg0: i32) -> (i32, i32) {
    %c0_i32 = arith.constant 0 : i32
    %c0_i32_0 = arith.constant 0 : i32
    return %arg0, %c0_i32 : i32, i32
  }
  func.func @transform_8(%arg0: i32) -> (i32, i32) {
    %c0_i32 = arith.constant 0 : i32
    %c0_i32_0 = arith.constant 0 : i32
    return %arg0, %c0_i32 : i32, i32
  }
}

</mosaic_0001>

<llo_original>
// kernel: tpu_custom_call.1
$region0: #{tpu_custom_call.1}
  #allocation0 [shape = 'u32[]', space=smem, size = 0x4, offset = 0x4, fixed_abs, tag = 'smem constant byte address 0x4 - core index']
  #allocation1 [shape = 'u32[144,128]{1,0:T(1,128)}', space=vmem, size = 0x12000, scoped, tag = 'internal scratch']
  %s0 = inlined_call_operand.hbm [shape: bf16[16,128], index: 0, kind: input, shape index: {}]
  %s1 = inlined_call_operand.hbm [shape: bf16[128,256], index: 1, kind: input, shape index: {}]
  %s2 = inlined_call_operand.vmem [shape: f32[1,256], index: 2, kind: input, shape index: {}]
  %s3 = inlined_call_operand.hbm [shape: bf16[128,128], index: 3, kind: input, shape index: {}]
  %s4 = inlined_call_operand.vmem [shape: f32[1,128], index: 4, kind: input, shape index: {}]
  %s5 = inlined_call_operand.hbm [shape: bf16[128,128], index: 5, kind: input, shape index: {}]
  %s6 = inlined_call_operand.vmem [shape: f32[1,128], index: 6, kind: input, shape index: {}]
  %s7 = inlined_call_operand.hbm [shape: f32[16,128], index: 7, kind: output, shape index: {0}]
  %s8 = inlined_call_operand.hbm [shape: f32[16,128], index: 8, kind: output, shape index: {1}]
  %9 = xla_tuple %s7, %s8
  %s10 = sld [smem:[#allocation0]]
  $region62: #{tpu_custom_call.1} parent=0
    _
  %s12 = ssub.s32 1, %s10
  %s13 = scalar_select 0, %s12, %s10
  $region1: #{tpu_custom_call.1} parent=0
    #allocation2 [shape = 'u8[4096]{0}', space=vmem, size = 0x1000, scoped, tag = 'input window, operand 0, single buffered']
    #allocation3 [shape = 's32[1]{0}', space=sflag, size = 0x4, scoped, tag = 'scoped memory for tpu_custom_call.1']
    #allocation4 [shape = 's32[1]{0}', space=sflag, size = 0x4, scoped, tag = 'scoped memory for tpu_custom_call.1']
    #allocation5 [shape = 'u8[65536]{0}', space=vmem, size = 0x10000, scoped, tag = 'input window, operand 1, single buffered']
    #allocation6 [shape = 's32[1]{0}', space=sflag, size = 0x4, scoped, tag = 'scoped memory for tpu_custom_call.1']
    #allocation7 [shape = 'u8[32768]{0}', space=vmem, size = 0x8000, scoped, tag = 'input window, operand 3, single buffered']
    #allocation8 [shape = 'u8[32768]{0}', space=vmem, size = 0x8000, scoped, tag = 'input window, operand 5, single buffered']
    #allocation9 [shape = 's32[1]{0}', space=sflag, size = 0x4, scoped, tag = 'scoped memory for tpu_custom_call.1']
    #allocation10 [shape = 'u8[8192]{0}', space=vmem, size = 0x2000, scoped, tag = 'output window, operand 0, single buffered']
    #allocation11 [shape = 'u8[8192]{0}', space=vmem, size = 0x2000, scoped, tag = 'output window, operand 1, single buffered']
    #allocation12 [shape = 's32[1]{0}', space=sflag, size = 0x4, scoped, tag = 'scoped memory for tpu_custom_call.1']
    %14 = vsyncpa [#allocation3], 0
    %15 = vsyncpa [#allocation6], 0
    %16 = vsyncpa [#allocation9], 0
    %17 = vsyncpa [#allocation4], 0
    %18 = vsyncpa [#allocation12], 0
    // Predicated region
    $region2: #{tpu_custom_call.1} parent=1 // pred_check
      _
    $region3: #{tpu_custom_call.1} parent=1 // pred_check_branch
      %20 = sbr.rel (0) target = $region5
    $region4: #{tpu_custom_call.1} parent=1 // pred_region
      %s22 = ssub.s32 128, 128
      %23 = vsyncadd [#allocation3], %s22
      %s24 = sshll.u32 [#allocation2], 4
      %s25 = int_to_ptr.vmem [resolvable:$true] %s24
      %30 = dma.hbm_to_vmem [thread:$0]  %s0, 128, %s25, [#allocation3], 64, 64, 4
    $region5: #{tpu_custom_call.1} parent=1 // pred_fallthru
      _
    // Predicated region
    $region6: #{tpu_custom_call.1} parent=1 // pred_check
      _
    $region7: #{tpu_custom_call.1} parent=1 // pred_check_branch
      %32 = sbr.rel (0) target = $region9
    $region8: #{tpu_custom_call.1} parent=1 // pred_region
      %s34 = ssub.s32 2048, 2048
      %35 = vsyncadd [#allocation6], %s34
      %s36 = sshll.u32 [#allocation5], 4
      %s37 = int_to_ptr.vmem [resolvable:$true] %s36
      %42 = dma.hbm_to_vmem [thread:$0]  %s1, 2048, %s37, [#allocation6], 128, 128, 8
    $region9: #{tpu_custom_call.1} parent=1 // pred_fallthru
      _
    // Predicated region
    $region10: #{tpu_custom_call.1} parent=1 // pred_check
      _
    $region11: #{tpu_custom_call.1} parent=1 // pred_check_branch
      %44 = sbr.rel (0) target = $region13
    $region12: #{tpu_custom_call.1} parent=1 // pred_region
      _
    $region13: #{tpu_custom_call.1} parent=1 // pred_fallthru
      _
    // Predicated region
    $region14: #{tpu_custom_call.1} parent=1 // pred_check
      _
    $region15: #{tpu_custom_call.1} parent=1 // pred_check_branch
      %46 = sbr.rel (0) target = $region17
    $region16: #{tpu_custom_call.1} parent=1 // pred_region
      %s48 = ssub.s32 1024, 1024
      %49 = vsyncadd [#allocation6], %s48
      %s50 = sshll.u32 [#allocation7], 4
      %s51 = int_to_ptr.vmem [resolvable:$true] %s50
      %56 = dma.hbm_to_vmem [thread:$0]  %s3, 1024, %s51, [#allocation6], 64, 64, 4
    $region17: #{tpu_custom_call.1} parent=1 // pred_fallthru
      _
    // Predicated region
    $region18: #{tpu_custom_call.1} parent=1 // pred_check
      _
    $region19: #{tpu_custom_call.1} parent=1 // pred_check_branch
      %58 = sbr.rel (0) target = $region21
    $region20: #{tpu_custom_call.1} parent=1 // pred_region
      _
    $region21: #{tpu_custom_call.1} parent=1 // pred_fallthru
      _
    // Predicated region
    $region22: #{tpu_custom_call.1} parent=1 // pred_check
      _
    $region23: #{tpu_custom_call.1} parent=1 // pred_check_branch
      %60 = sbr.rel (0) target = $region25
    $region24: #{tpu_custom_call.1} parent=1 // pred_region
      %s62 = ssub.s32 1024, 1024
      %63 = vsyncadd [#allocation9], %s62
      %s64 = sshll.u32 [#allocation8], 4
      %s65 = int_to_ptr.vmem [resolvable:$true] %s64
      %70 = dma.hbm_to_vmem [thread:$0]  %s5, 1024, %s65, [#allocation9], 64, 64, 4
    $region25: #{tpu_custom_call.1} parent=1 // pred_fallthru
      _
    // Predicated region
    $region26: #{tpu_custom_call.1} parent=1 // pred_check
      _
    $region27: #{tpu_custom_call.1} parent=1 // pred_check_branch
      %72 = sbr.rel (0) target = $region29
    $region28: #{tpu_custom_call.1} parent=1 // pred_region
      _
    $region29: #{tpu_custom_call.1} parent=1 // pred_fallthru
      _
    // Predicated region
    $region30: #{tpu_custom_call.1} parent=1 // pred_check
      _
    $region31: #{tpu_custom_call.1} parent=1 // pred_check_branch
      %74 = sbr.rel (0) target = $region33
    $region32: #{tpu_custom_call.1} parent=1 // pred_region
      %75 = dma.done [#allocation3], 128
    $region33: #{tpu_custom_call.1} parent=1 // pred_fallthru
      _
    // Predicated region
    $region34: #{tpu_custom_call.1} parent=1 // pred_check
      _
    $region35: #{tpu_custom_call.1} parent=1 // pred_check_branch
      %77 = sbr.rel (0) target = $region37
    $region36: #{tpu_custom_call.1} parent=1 // pred_region
      %78 = dma.done [#allocation6], 2048
    $region37: #{tpu_custom_call.1} parent=1 // pred_fallthru
      _
    // Predicated region
    $region38: #{tpu_custom_call.1} parent=1 // pred_check
      _
    $region39: #{tpu_custom_call.1} parent=1 // pred_check_branch
      %80 = sbr.rel (0) target = $region41
    $region40: #{tpu_custom_call.1} parent=1 // pred_region
      %81 = dma.done [#allocation6], 1024
    $region41: #{tpu_custom_call.1} parent=1 // pred_fallthru
      _
    // Predicated region
    $region42: #{tpu_custom_call.1} parent=1 // pred_check
      _
    $region43: #{tpu_custom_call.1} parent=1 // pred_check_branch
      %83 = sbr.rel (0) target = $region45
    $region44: #{tpu_custom_call.1} parent=1 // pred_region
      %84 = dma.done [#allocation9], 1024
    $region45: #{tpu_custom_call.1} parent=1 // pred_fallthru
      _
    %v86 = vld [vmem:[#allocation2] sm:$0xf]
    %v87 = vld [vmem:[#allocation2 + $0x4] sm:$0xf]
    %v88 = vld [vmem:[#allocation5] sm:$0xff]
    %v89 = vld [vmem:[#allocation5 + $0x8] sm:$0xff]
    %v90 = vld [vmem:[#allocation5 + $0x10] sm:$0xff]
    %v91 = vld [vmem:[#allocation5 + $0x18] sm:$0xff]
    %v92 = vld [vmem:[#allocation5 + $0x20] sm:$0xff]
    %v93 = vld [vmem:[#allocation5 + $0x28] sm:$0xff]
    %v94 = vld [vmem:[#allocation5 + $0x30] sm:$0xff]
    %v95 = vld [vmem:[#allocation5 + $0x38] sm:$0xff]
    %v96 = vld [vmem:[#allocation5 + $0x40] sm:$0xff]
    %v97 = vld [vmem:[#allocation5 + $0x48] sm:$0xff]
    %v98 = vld [vmem:[#allocation5 + $0x50] sm:$0xff]
    %v99 = vld [vmem:[#allocation5 + $0x58] sm:$0xff]
    %v100 = vld [vmem:[#allocation5 + $0x60] sm:$0xff]
    %v101 = vld [vmem:[#allocation5 + $0x68] sm:$0xff]
    %v102 = vld [vmem:[#allocation5 + $0x70] sm:$0xff]
    %v103 = vld [vmem:[#allocation5 + $0x78] sm:$0xff]
    %v104 = vld [vmem:[%s2] sm:$0x3]
    %v106 = vlaneseq
    %v107 = vshrl.u32 %v106, 7
    %v108 = vsub.s32 0, %v107
    %v109 = vrot.slane %v104, %v108
    %v110 = vlaneseq
    %v111 = vshrl.u32 %v110, 7
    %v112 = vsub.s32 1, %v111
    %v113 = vrot.slane %v104, %v112
    %v118 = vunpack.c.l.b16 %v86
    %v119 = vunpack.c.l.b16 %v87
    %v120 = vpack.c.b16 %v119, %v118
    %v138 = vunpack.c.l.b16 %v88
    %v139 = vunpack.c.h.b16 %v88
    %v140 = vunpack.c.l.b16 %v89
    %v141 = vunpack.c.h.b16 %v89
    %v142 = vunpack.c.l.b16 %v90
    %v143 = vunpack.c.h.b16 %v90
    %v144 = vunpack.c.l.b16 %v91
    %v145 = vunpack.c.h.b16 %v91
    %v146 = vunpack.c.l.b16 %v92
    %v147 = vunpack.c.h.b16 %v92
    %v148 = vunpack.c.l.b16 %v93
    %v149 = vunpack.c.h.b16 %v93
    %v150 = vunpack.c.l.b16 %v94
    %v151 = vunpack.c.h.b16 %v94
    %v152 = vunpack.c.l.b16 %v95
    %v153 = vunpack.c.h.b16 %v95
    %v154 = vunpack.c.l.b16 %v96
    %v155 = vunpack.c.h.b16 %v96
    %v156 = vunpack.c.l.b16 %v97
    %v157 = vunpack.c.h.b16 %v97
    %v158 = vunpack.c.l.b16 %v98
    %v159 = vunpack.c.h.b16 %v98
    %v160 = vunpack.c.l.b16 %v99
    %v161 = vunpack.c.h.b16 %v99
    %v162 = vunpack.c.l.b16 %v100
    %v163 = vunpack.c.h.b16 %v100
    %v164 = vunpack.c.l.b16 %v101
    %v165 = vunpack.c.h.b16 %v101
    %v166 = vunpack.c.l.b16 %v102
    %v167 = vunpack.c.h.b16 %v102
    %v168 = vunpack.c.l.b16 %v103
    %v169 = vunpack.c.h.b16 %v103
    %v170 = vpack.c.b16 %v140, %v138
    %v171 = vpack.c.b16 %v141, %v139
    %v172 = vpack.c.b16 %v144, %v142
    %v173 = vpack.c.b16 %v145, %v143
    %v174 = vpack.c.b16 %v148, %v146
    %v175 = vpack.c.b16 %v149, %v147
    %v176 = vpack.c.b16 %v152, %v150
    %v177 = vpack.c.b16 %v153, %v151
    %v178 = vpack.c.b16 %v156, %v154
    %v179 = vpack.c.b16 %v157, %v155
    %v180 = vpack.c.b16 %v160, %v158
    %v181 = vpack.c.b16 %v161, %v159
    %v182 = vpack.c.b16 %v164, %v162
    %v183 = vpack.c.b16 %v165, %v163
    %v184 = vpack.c.b16 %v168, %v166
    %v185 = vpack.c.b16 %v169, %v167
    %202 = vmatprep.subr.bf16.mxu0 %v171
    %203 = vmatpush1.bf16.msra.mxu0 %v170
    %204 = vmatprep.subr.bf16.mxu0 %v173
    %205 = vmatpush1.bf16.msra.mxu0 %v172
    %206 = vmatprep.subr.bf16.mxu0 %v175
    %207 = vmatpush1.bf16.msra.mxu0 %v174
    %208 = vmatprep.subr.bf16.mxu0 %v177
    %209 = vmatpush1.bf16.msra.mxu0 %v176
    %210 = vmatprep.subr.bf16.mxu0 %v179
    %211 = vmatpush1.bf16.msra.mxu0 %v178
    %212 = vmatprep.subr.bf16.mxu0 %v181
    %213 = vmatpush1.bf16.msra.mxu0 %v180
    %214 = vmatprep.subr.bf16.mxu0 %v183
    %215 = vmatpush1.bf16.msra.mxu0 %v182
    %216 = vmatprep.subr.bf16.mxu0 %v185
    %217 = vmatpush1.bf16.msra.mxu0 %v184
    %218 = vmatprep.subr.bf16.mxu0 0
    %219 = vmatpush1.bf16.msra.mxu0 0
    %220 = vmatprep.subr.bf16.mxu0 0
    %221 = vmatpush1.bf16.msra.mxu0 0
    %222 = vmatprep.subr.bf16.mxu0 0
    %223 = vmatpush1.bf16.msra.mxu0 0
    %224 = vmatprep.subr.bf16.mxu0 0
    %225 = vmatpush1.bf16.msra.mxu0 0
    %226 = vmatprep.subr.bf16.mxu0 0
    %227 = vmatpush1.bf16.msra.mxu0 0
    %228 = vmatprep.subr.bf16.mxu0 0
    %229 = vmatpush1.bf16.msra.mxu0 0
    %230 = vmatprep.subr.bf16.mxu0 0
    %231 = vmatpush1.bf16.msra.mxu0 0
    %232 = vmatprep.subr.bf16.mxu0 0
    %233 = vmatpush1.bf16.msra.mxu0 0
    %234 = vmatprep.mubr.bf16.mxu0 0
    %235 = vmatmul.mubr.bf16.gmra.mrb[0].mxu0 %v120
    %v236 = vpop.f32.mrb[0].mxu0
    %v237 = vadd.f32 %v109, %v236
    %v238 = vpop.f32.mrb[0].mxu0
    %v239 = vadd.f32 %v113, %v238
    %v240 = vpop.f32.mrb[0].mxu0
    %v241 = vadd.f32 %v109, %v240
    %v242 = vpop.f32.mrb[0].mxu0
    %v243 = vadd.f32 %v113, %v242
    %244 = vdwg.mxu0
    %v245 = vmax.f32 %v237, 0.0
    %v246 = vmax.f32 %v239, 0.0
    %v247 = vmax.f32 %v241, 0.0
    %v248 = vmax.f32 %v243, 0.0
    %v249 = vpack.c.bf16 %v247, %v245
    %v250 = vpack.c.bf16 %v248, %v246
    %v251 = vld [vmem:[#allocation7] sm:$0xf]
    %v252 = vld [vmem:[#allocation7 + $0x4] sm:$0xf]
    %v253 = vld [vmem:[#allocation7 + $0x8] sm:$0xf]
    %v254 = vld [vmem:[#allocation7 + $0xc] sm:$0xf]
    %v255 = vld [vmem:[#allocation7 + $0x10] sm:$0xf]
    %v256 = vld [vmem:[#allocation7 + $0x14] sm:$0xf]
    %v257 = vld [vmem:[#allocation7 + $0x18] sm:$0xf]
    %v258 = vld [vmem:[#allocation7 + $0x1c] sm:$0xf]
    %v259 = vld [vmem:[#allocation7 + $0x20] sm:$0xf]
    %v260 = vld [vmem:[#allocation7 + $0x24] sm:$0xf]
    %v261 = vld [vmem:[#allocation7 + $0x28] sm:$0xf]
    %v262 = vld [vmem:[#allocation7 + $0x2c] sm:$0xf]
    %v263 = vld [vmem:[#allocation7 + $0x30] sm:$0xf]
    %v264 = vld [vmem:[#allocation7 + $0x34] sm:$0xf]
    %v265 = vld [vmem:[#allocation7 + $0x38] sm:$0xf]
    %v266 = vld [vmem:[#allocation7 + $0x3c] sm:$0xf]
    %v267 = vld [vmem:[%s4] sm:$0x1]
    %v269 = vlaneseq
    %v270 = vshrl.u32 %v269, 7
    %v271 = vsub.s32 0, %v270
    %v272 = vrot.slane %v267, %v271
    %v290 = vunpack.c.l.b16 %v251
    %v291 = vunpack.c.l.b16 %v252
    %v292 = vunpack.c.l.b16 %v253
    %v293 = vunpack.c.l.b16 %v254
    %v294 = vunpack.c.l.b16 %v255
    %v295 = vunpack.c.l.b16 %v256
    %v296 = vunpack.c.l.b16 %v257
    %v297 = vunpack.c.l.b16 %v258
    %v298 = vunpack.c.l.b16 %v259
    %v299 = vunpack.c.l.b16 %v260
    %v300 = vunpack.c.l.b16 %v261
    %v301 = vunpack.c.l.b16 %v262
    %v302 = vunpack.c.l.b16 %v263
    %v303 = vunpack.c.l.b16 %v264
    %v304 = vunpack.c.l.b16 %v265
    %v305 = vunpack.c.l.b16 %v266
    %v306 = vpack.c.b16 %v291, %v290
    %v307 = vpack.c.b16 %v293, %v292
    %v308 = vpack.c.b16 %v295, %v294
    %v309 = vpack.c.b16 %v297, %v296
    %v310 = vpack.c.b16 %v299, %v298
    %v311 = vpack.c.b16 %v301, %v300
    %v312 = vpack.c.b16 %v303, %v302
    %v313 = vpack.c.b16 %v305, %v304
    %322 = vmatprep.subr.bf16.mxu0 0
    %323 = vmatpush1.bf16.msra.mxu0 %v306
    %324 = vmatprep.subr.bf16.mxu0 0
    %325 = vmatpush1.bf16.msra.mxu0 %v307
    %326 = vmatprep.subr.bf16.mxu0 0
    %327 = vmatpush1.bf16.msra.mxu0 %v308
    %328 = vmatprep.subr.bf16.mxu0 0
    %329 = vmatpush1.bf16.msra.mxu0 %v309
    %330 = vmatprep.subr.bf16.mxu0 0
    %331 = vmatpush1.bf16.msra.mxu0 %v310
    %332 = vmatprep.subr.bf16.mxu0 0
    %333 = vmatpush1.bf16.msra.mxu0 %v311
    %334 = vmatprep.subr.bf16.mxu0 0
    %335 = vmatpush1.bf16.msra.mxu0 %v312
    %336 = vmatprep.subr.bf16.mxu0 0
    %337 = vmatpush1.bf16.msra.mxu0 %v313
    %338 = vmatprep.subr.bf16.mxu0 0
    %339 = vmatpush1.bf16.msra.mxu0 0
    %340 = vmatprep.subr.bf16.mxu0 0
    %341 = vmatpush1.bf16.msra.mxu0 0
    %342 = vmatprep.subr.bf16.mxu0 0
    %343 = vmatpush1.bf16.msra.mxu0 0
    %344 = vmatprep.subr.bf16.mxu0 0
    %345 = vmatpush1.bf16.msra.mxu0 0
    %346 = vmatprep.subr.bf16.mxu0 0
    %347 = vmatpush1.bf16.msra.mxu0 0
    %348 = vmatprep.subr.bf16.mxu0 0
    %349 = vmatpush1.bf16.msra.mxu0 0
    %350 = vmatprep.subr.bf16.mxu0 0
    %351 = vmatpush1.bf16.msra.mxu0 0
    %352 = vmatprep.subr.bf16.mxu0 0
    %353 = vmatpush1.bf16.msra.mxu0 0
    %354 = vmatprep.mubr.bf16.mxu0 0
    %355 = vmatmul.mubr.bf16.gmra.mrb[0].mxu0 %v249
    %v356 = vpop.f32.mrb[0].mxu0
    %v357 = vadd.f32 %v272, %v356
    %v358 = vpop.f32.mrb[0].mxu0
    %v359 = vpop.f32.mrb[0].mxu0
    %v360 = vadd.f32 %v272, %v359
    %v361 = vpop.f32.mrb[0].mxu0
    %362 = vdwg.mxu0
    %v363 = vld [vmem:[#allocation8] sm:$0xf]
    %v364 = vld [vmem:[#allocation8 + $0x4] sm:$0xf]
    %v365 = vld [vmem:[#allocation8 + $0x8] sm:$0xf]
    %v366 = vld [vmem:[#allocation8 + $0xc] sm:$0xf]
    %v367 = vld [vmem:[#allocation8 + $0x10] sm:$0xf]
    %v368 = vld [vmem:[#allocation8 + $0x14] sm:$0xf]
    %v369 = vld [vmem:[#allocation8 + $0x18] sm:$0xf]
    %v370 = vld [vmem:[#allocation8 + $0x1c] sm:$0xf]
    %v371 = vld [vmem:[#allocation8 + $0x20] sm:$0xf]
    %v372 = vld [vmem:[#allocation8 + $0x24] sm:$0xf]
    %v373 = vld [vmem:[#allocation8 + $0x28] sm:$0xf]
    %v374 = vld [vmem:[#allocation8 + $0x2c] sm:$0xf]
    %v375 = vld [vmem:[#allocation8 + $0x30] sm:$0xf]
    %v376 = vld [vmem:[#allocation8 + $0x34] sm:$0xf]
    %v377 = vld [vmem:[#allocation8 + $0x38] sm:$0xf]
    %v378 = vld [vmem:[#allocation8 + $0x3c] sm:$0xf]
    %v379 = vld [vmem:[%s6] sm:$0x1]
    %v381 = vlaneseq
    %v382 = vshrl.u32 %v381, 7
    %v383 = vsub.s32 0, %v382
    %v384 = vrot.slane %v379, %v383
    %v402 = vunpack.c.l.b16 %v363
    %v403 = vunpack.c.l.b16 %v364
    %v404 = vunpack.c.l.b16 %v365
    %v405 = vunpack.c.l.b16 %v366
    %v406 = vunpack.c.l.b16 %v367
    %v407 = vunpack.c.l.b16 %v368
    %v408 = vunpack.c.l.b16 %v369
    %v409 = vunpack.c.l.b16 %v370
    %v410 = vunpack.c.l.b16 %v371
    %v411 = vunpack.c.l.b16 %v372
    %v412 = vunpack.c.l.b16 %v373
    %v413 = vunpack.c.l.b16 %v374
    %v414 = vunpack.c.l.b16 %v375
    %v415 = vunpack.c.l.b16 %v376
    %v416 = vunpack.c.l.b16 %v377
    %v417 = vunpack.c.l.b16 %v378
    %v418 = vpack.c.b16 %v403, %v402
    %v419 = vpack.c.b16 %v405, %v404
    %v420 = vpack.c.b16 %v407, %v406
    %v421 = vpack.c.b16 %v409, %v408
    %v422 = vpack.c.b16 %v411, %v410
    %v423 = vpack.c.b16 %v413, %v412
    %v424 = vpack.c.b16 %v415, %v414
    %v425 = vpack.c.b16 %v417, %v416
    %434 = vmatprep.subr.bf16.mxu0 0
    %435 = vmatpush1.bf16.msra.mxu0 %v418
    %436 = vmatprep.subr.bf16.mxu0 0
    %437 = vmatpush1.bf16.msra.mxu0 %v419
    %438 = vmatprep.subr.bf16.mxu0 0
    %439 = vmatpush1.bf16.msra.mxu0 %v420
    %440 = vmatprep.subr.bf16.mxu0 0
    %441 = vmatpush1.bf16.msra.mxu0 %v421
    %442 = vmatprep.subr.bf16.mxu0 0
    %443 = vmatpush1.bf16.msra.mxu0 %v422
    %444 = vmatprep.subr.bf16.mxu0 0
    %445 = vmatpush1.bf16.msra.mxu0 %v423
    %446 = vmatprep.subr.bf16.mxu0 0
    %447 = vmatpush1.bf16.msra.mxu0 %v424
    %448 = vmatprep.subr.bf16.mxu0 0
    %449 = vmatpush1.bf16.msra.mxu0 %v425
    %450 = vmatprep.subr.bf16.mxu0 0
    %451 = vmatpush1.bf16.msra.mxu0 0
    %452 = vmatprep.subr.bf16.mxu0 0
    %453 = vmatpush1.bf16.msra.mxu0 0
    %454 = vmatprep.subr.bf16.mxu0 0
    %455 = vmatpush1.bf16.msra.mxu0 0
    %456 = vmatprep.subr.bf16.mxu0 0
    %457 = vmatpush1.bf16.msra.mxu0 0
    %458 = vmatprep.subr.bf16.mxu0 0
    %459 = vmatpush1.bf16.msra.mxu0 0
    %460 = vmatprep.subr.bf16.mxu0 0
    %461 = vmatpush1.bf16.msra.mxu0 0
    %462 = vmatprep.subr.bf16.mxu0 0
    %463 = vmatpush1.bf16.msra.mxu0 0
    %464 = vmatprep.subr.bf16.mxu0 0
    %465 = vmatpush1.bf16.msra.mxu0 0
    %466 = vmatprep.mubr.bf16.mxu0 0
    %467 = vmatmul.mubr.bf16.gmra.mrb[0].mxu0 %v250
    %v468 = vpop.f32.mrb[0].mxu0
    %v469 = vadd.f32 %v384, %v468
    %v470 = vpop.f32.mrb[0].mxu0
    %v471 = vpop.f32.mrb[0].mxu0
    %v472 = vadd.f32 %v384, %v471
    %v473 = vpop.f32.mrb[0].mxu0
    %474 = vdwg.mxu0
    %475 = vst [vmem:[#allocation10] sm:$0xff] %v357
    %476 = vst [vmem:[#allocation10 + $0x8] sm:$0xff] %v360
    %477 = vst [vmem:[#allocation11] sm:$0xff] %v469
    %478 = vst [vmem:[#allocation11 + $0x8] sm:$0xff] %v472
    // Predicated region
    $region46: #{tpu_custom_call.1} parent=1 // pred_check
      _
    $region47: #{tpu_custom_call.1} parent=1 // pred_check_branch
      %480 = sbr.rel (0) target = $region49
    $region48: #{tpu_custom_call.1} parent=1 // pred_region
      %s482 = ssub.s32 256, 256
      %483 = vsyncadd [#allocation4], %s482
      %s484 = sshll.u32 [#allocation10], 4
      %s485 = int_to_ptr.vmem [resolvable:$true] %s484
      %490 = dma.vmem_to_hbm [thread:$0]  %s485, 256, %s7, [#allocation4], 128, 128, 8
    $region49: #{tpu_custom_call.1} parent=1 // pred_fallthru
      _
    // Predicated region
    $region50: #{tpu_custom_call.1} parent=1 // pred_check
      _
    $region51: #{tpu_custom_call.1} parent=1 // pred_check_branch
      %492 = sbr.rel (0) target = $region53
    $region52: #{tpu_custom_call.1} parent=1 // pred_region
      %s494 = ssub.s32 256, 256
      %495 = vsyncadd [#allocation12], %s494
      %s496 = sshll.u32 [#allocation11], 4
      %s497 = int_to_ptr.vmem [resolvable:$true] %s496
      %502 = dma.vmem_to_hbm [thread:$0]  %s497, 256, %s8, [#allocation12], 128, 128, 8
    $region53: #{tpu_custom_call.1} parent=1 // pred_fallthru
      _
    // Predicated region
    $region54: #{tpu_custom_call.1} parent=1 // pred_check
      _
    $region55: #{tpu_custom_call.1} parent=1 // pred_check_branch
      %504 = sbr.rel (0) target = $region57
    $region56: #{tpu_custom_call.1} parent=1 // pred_region
      %505 = dma.done [#allocation4], 256
    $region57: #{tpu_custom_call.1} parent=1 // pred_fallthru
      _
    // Predicated region
    $region58: #{tpu_custom_call.1} parent=1 // pred_check
      _
    $region59: #{tpu_custom_call.1} parent=1 // pred_check_branch
      %507 = sbr.rel (0) target = $region61
    $region60: #{tpu_custom_call.1} parent=1 // pred_region
      %508 = dma.done [#allocation12], 256
    $region61: #{tpu_custom_call.1} parent=1 // pred_fallthru
      _
    %509 = vsyncpa [#allocation3], 1
    %510 = vsyncpa [#allocation6], 1
    %511 = vsyncpa [#allocation9], 1
    %512 = vsyncpa [#allocation4], 1
    %513 = vsyncpa [#allocation12], 1

// kernel: tpu_custom_call.1
$region0: #{tpu_custom_call.1}
  #allocation0 [shape = 'u32[]', space=smem, size = 0x4, offset = 0x4, fixed_abs, tag = 'smem constant byte address 0x4 - core index']
  #allocation1 [shape = 'u32[144,128]{1,0:T(1,128)}', space=vmem, size = 0x12000, scoped, tag = 'internal scratch']
  %s0 = inlined_call_operand.hbm [shape: bf16[16,128], index: 0, kind: input, shape index: {}]
  %s1 = inlined_call_operand.hbm [shape: bf16[128,256], index: 1, kind: input, shape index: {}]
  %s2 = inlined_call_operand.vmem [shape: f32[1,256], index: 2, kind: input, shape index: {}]
  %s3 = inlined_call_operand.hbm [shape: bf16[128,128], index: 3, kind: input, shape index: {}]
  %s4 = inlined_call_operand.vmem [shape: f32[1,128], index: 4, kind: input, shape index: {}]
  %s5 = inlined_call_operand.hbm [shape: bf16[128,128], index: 5, kind: input, shape index: {}]
  %s6 = inlined_call_operand.vmem [shape: f32[1,128], index: 6, kind: input, shape index: {}]
  %s7 = inlined_call_operand.hbm [shape: f32[16,128], index: 7, kind: output, shape index: {0}]
  %s8 = inlined_call_operand.hbm [shape: f32[16,128], index: 8, kind: output, shape index: {1}]
  %9 = xla_tuple %s7, %s8
  %s10 = sld [smem:[#allocation0]]
  $region62: #{tpu_custom_call.1} parent=0
    _
  %s12 = ssub.s32 1, %s10
  %s13 = scalar_select 0, %s12, %s10
  $region1: #{tpu_custom_call.1} parent=0
    #allocation2 [shape = 'u8[4096]{0}', space=vmem, size = 0x1000, scoped, tag = 'input window, operand 0, single buffered']
    #allocation3 [shape = 's32[1]{0}', space=sflag, size = 0x4, scoped, tag = 'scoped memory for tpu_custom_call.1']
    #allocation4 [shape = 's32[1]{0}', space=sflag, size = 0x4, scoped, tag = 'scoped memory for tpu_custom_call.1']
    #allocation5 [shape = 'u8[65536]{0}', space=vmem, size = 0x10000, scoped, tag = 'input window, operand 1, single buffered']
    #allocation6 [shape = 's32[1]{0}', space=sflag, size = 0x4, scoped, tag = 'scoped memory for tpu_custom_call.1']
    #allocation7 [shape = 'u8[32768]{0}', space=vmem, size = 0x8000, scoped, tag = 'input window, operand 3, single buffered']
    #allocation8 [shape = 'u8[32768]{0}', space=vmem, size = 0x8000, scoped, tag = 'input window, operand 5, single buffered']
    #allocation9 [shape = 's32[1]{0}', space=sflag, size = 0x4, scoped, tag = 'scoped memory for tpu_custom_call.1']
    #allocation10 [shape = 'u8[8192]{0}', space=vmem, size = 0x2000, scoped, tag = 'output window, operand 0, single buffered']
    #allocation11 [shape = 'u8[8192]{0}', space=vmem, size = 0x2000, scoped, tag = 'output window, operand 1, single buffered']
    #allocation12 [shape = 's32[1]{0}', space=sflag, size = 0x4, scoped, tag = 'scoped memory for tpu_custom_call.1']
    %14 = vsyncpa [#allocation3], 0
    %15 = vsyncpa [#allocation6], 0
    %16 = vsyncpa [#allocation9], 0
    %17 = vsyncpa [#allocation4], 0
    %18 = vsyncpa [#allocation12], 0
    // Predicated region
    $region2: #{tpu_custom_call.1} parent=1 // pred_check
      _
    $region3: #{tpu_custom_call.1} parent=1 // pred_check_branch
      %20 = sbr.rel (0) target = $region5
    $region4: #{tpu_custom_call.1} parent=1 // pred_region
      %s22 = ssub.s32 128, 128
      %23 = vsyncadd [#allocation3], %s22
      %s24 = sshll.u32 [#allocation2], 4
      %s25 = int_to_ptr.vmem [resolvable:$true] %s24
      %30 = dma.hbm_to_vmem [thread:$0]  %s0, 128, %s25, [#allocation3], 64, 64, 4
    $region5: #{tpu_custom_call.1} parent=1 // pred_fallthru
      _
    // Predicated region
    $region6: #{tpu_custom_call.1} parent=1 // pred_check
      _
    $region7: #{tpu_custom_call.1} parent=1 // pred_check_branch
      %32 = sbr.rel (0) target = $region9
    $region8: #{tpu_custom_call.1} parent=1 // pred_region
      %s34 = ssub.s32 2048, 2048
      %35 = vsyncadd [#allocation6], %s34
      %s36 = sshll.u32 [#allocation5], 4
      %s37 = int_to_ptr.vmem [resolvable:$true] %s36
      %42 = dma.hbm_to_vmem [thread:$0]  %s1, 2048, %s37, [#allocation6], 128, 128, 8
    $region9: #{tpu_custom_call.1} parent=1 // pred_fallthru
      _
    // Predicated region
    $region10: #{tpu_custom_call.1} parent=1 // pred_check
      _
    $region11: #{tpu_custom_call.1} parent=1 // pred_check_branch
      %44 = sbr.rel (0) target = $region13
    $region12: #{tpu_custom_call.1} parent=1 // pred_region
      _
    $region13: #{tpu_custom_call.1} parent=1 // pred_fallthru
      _
    // Predicated region
    $region14: #{tpu_custom_call.1} parent=1 // pred_check
      _
    $region15: #{tpu_custom_call.1} parent=1 // pred_check_branch
      %46 = sbr.rel (0) target = $region17
    $region16: #{tpu_custom_call.1} parent=1 // pred_region
      %s48 = ssub.s32 1024, 1024
      %49 = vsyncadd [#allocation6], %s48
      %s50 = sshll.u32 [#allocation7], 4
      %s51 = int_to_ptr.vmem [resolvable:$true] %s50
      %56 = dma.hbm_to_vmem [thread:$0]  %s3, 1024, %s51, [#allocation6], 64, 64, 4
    $region17: #{tpu_custom_call.1} parent=1 // pred_fallthru
      _
    // Predicated region
    $region18: #{tpu_custom_call.1} parent=1 // pred_check
      _
    $region19: #{tpu_custom_call.1} parent=1 // pred_check_branch
      %58 = sbr.rel (0) target = $region21
    $region20: #{tpu_custom_call.1} parent=1 // pred_region
      _
    $region21: #{tpu_custom_call.1} parent=1 // pred_fallthru
      _
    // Predicated region
    $region22: #{tpu_custom_call.1} parent=1 // pred_check
      _
    $region23: #{tpu_custom_call.1} parent=1 // pred_check_branch
      %60 = sbr.rel (0) target = $region25
    $region24: #{tpu_custom_call.1} parent=1 // pred_region
      %s62 = ssub.s32 1024, 1024
      %63 = vsyncadd [#allocation9], %s62
      %s64 = sshll.u32 [#allocation8], 4
      %s65 = int_to_ptr.vmem [resolvable:$true] %s64
      %70 = dma.hbm_to_vmem [thread:$0]  %s5, 1024, %s65, [#allocation9], 64, 64, 4
    $region25: #{tpu_custom_call.1} parent=1 // pred_fallthru
      _
    // Predicated region
    $region26: #{tpu_custom_call.1} parent=1 // pred_check
      _
    $region27: #{tpu_custom_call.1} parent=1 // pred_check_branch
      %72 = sbr.rel (0) target = $region29
    $region28: #{tpu_custom_call.1} parent=1 // pred_region
      _
    $region29: #{tpu_custom_call.1} parent=1 // pred_fallthru
      _
    // Predicated region
    $region30: #{tpu_custom_call.1} parent=1 // pred_check
      _
    $region31: #{tpu_custom_call.1} parent=1 // pred_check_branch
      %74 = sbr.rel (0) target = $region33
    $region32: #{tpu_custom_call.1} parent=1 // pred_region
      %75 = dma.done [#allocation3], 128
    $region33: #{tpu_custom_call.1} parent=1 // pred_fallthru
      _
    // Predicated region
    $region34: #{tpu_custom_call.1} parent=1 // pred_check
      _
    $region35: #{tpu_custom_call.1} parent=1 // pred_check_branch
      %77 = sbr.rel (0) target = $region37
    $region36: #{tpu_custom_call.1} parent=1 // pred_region
      %78 = dma.done [#allocation6], 2048
    $region37: #{tpu_custom_call.1} parent=1 // pred_fallthru
      _
    // Predicated region
    $region38: #{tpu_custom_call.1} parent=1 // pred_check
      _
    $region39: #{tpu_custom_call.1} parent=1 // pred_check_branch
      %80 = sbr.rel (0) target = $region41
    $region40: #{tpu_custom_call.1} parent=1 // pred_region
      %81 = dma.done [#allocation6], 1024
    $region41: #{tpu_custom_call.1} parent=1 // pred_fallthru
      _
    // Predicated region
    $region42: #{tpu_custom_call.1} parent=1 // pred_check
      _
    $region43: #{tpu_custom_call.1} parent=1 // pred_check_branch
      %83 = sbr.rel (0) target = $region45
    $region44: #{tpu_custom_call.1} parent=1 // pred_region
      %84 = dma.done [#allocation9], 1024
    $region45: #{tpu_custom_call.1} parent=1 // pred_fallthru
      _
    %v86 = vld [vmem:[#allocation2] sm:$0xf]
    %v87 = vld [vmem:[#allocation2 + $0x4] sm:$0xf]
    %v88 = vld [vmem:[#allocation5] sm:$0xff]
    %v89 = vld [vmem:[#allocation5 + $0x8] sm:$0xff]
    %v90 = vld [vmem:[#allocation5 + $0x10] sm:$0xff]
    %v91 = vld [vmem:[#allocation5 + $0x18] sm:$0xff]
    %v92 = vld [vmem:[#allocation5 + $0x20] sm:$0xff]
    %v93 = vld [vmem:[#allocation5 + $0x28] sm:$0xff]
    %v94 = vld [vmem:[#allocation5 + $0x30] sm:$0xff]
    %v95 = vld [vmem:[#allocation5 + $0x38] sm:$0xff]
    %v96 = vld [vmem:[#allocation5 + $0x40] sm:$0xff]
    %v97 = vld [vmem:[#allocation5 + $0x48] sm:$0xff]
    %v98 = vld [vmem:[#allocation5 + $0x50] sm:$0xff]
    %v99 = vld [vmem:[#allocation5 + $0x58] sm:$0xff]
    %v100 = vld [vmem:[#allocation5 + $0x60] sm:$0xff]
    %v101 = vld [vmem:[#allocation5 + $0x68] sm:$0xff]
    %v102 = vld [vmem:[#allocation5 + $0x70] sm:$0xff]
    %v103 = vld [vmem:[#allocation5 + $0x78] sm:$0xff]
    %v104 = vld [vmem:[%s2] sm:$0x3]
    %v106 = vlaneseq
    %v107 = vshrl.u32 %v106, 7
    %v108 = vsub.s32 0, %v107
    %v109 = vrot.slane %v104, %v108
    %v110 = vlaneseq
    %v111 = vshrl.u32 %v110, 7
    %v112 = vsub.s32 1, %v111
    %v113 = vrot.slane %v104, %v112
    %v118 = vunpack.c.l.b16 %v86
    %v119 = vunpack.c.l.b16 %v87
    %v120 = vpack.c.b16 %v119, %v118
    %v138 = vunpack.c.l.b16 %v88
    %v139 = vunpack.c.h.b16 %v88
    %v140 = vunpack.c.l.b16 %v89
    %v141 = vunpack.c.h.b16 %v89
    %v142 = vunpack.c.l.b16 %v90
    %v143 = vunpack.c.h.b16 %v90
    %v144 = vunpack.c.l.b16 %v91
    %v145 = vunpack.c.h.b16 %v91
    %v146 = vunpack.c.l.b16 %v92
    %v147 = vunpack.c.h.b16 %v92
    %v148 = vunpack.c.l.b16 %v93
    %v149 = vunpack.c.h.b16 %v93
    %v150 = vunpack.c.l.b16 %v94
    %v151 = vunpack.c.h.b16 %v94
    %v152 = vunpack.c.l.b16 %v95
    %v153 = vunpack.c.h.b16 %v95
    %v154 = vunpack.c.l.b16 %v96
    %v155 = vunpack.c.h.b16 %v96
    %v156 = vunpack.c.l.b16 %v97
    %v157 = vunpack.c.h.b16 %v97
    %v158 = vunpack.c.l.b16 %v98
    %v159 = vunpack.c.h.b16 %v98
    %v160 = vunpack.c.l.b16 %v99
    %v161 = vunpack.c.h.b16 %v99
    %v162 = vunpack.c.l.b16 %v100
    %v163 = vunpack.c.h.b16 %v100
    %v164 = vunpack.c.l.b16 %v101
    %v165 = vunpack.c.h.b16 %v101
    %v166 = vunpack.c.l.b16 %v102
    %v167 = vunpack.c.h.b16 %v102
    %v168 = vunpack.c.l.b16 %v103
    %v169 = vunpack.c.h.b16 %v103
    %v170 = vpack.c.b16 %v140, %v138
    %v171 = vpack.c.b16 %v141, %v139
    %v172 = vpack.c.b16 %v144, %v142
    %v173 = vpack.c.b16 %v145, %v143
    %v174 = vpack.c.b16 %v148, %v146
    %v175 = vpack.c.b16 %v149, %v147
    %v176 = vpack.c.b16 %v152, %v150
    %v177 = vpack.c.b16 %v153, %v151
    %v178 = vpack.c.b16 %v156, %v154
    %v179 = vpack.c.b16 %v157, %v155
    %v180 = vpack.c.b16 %v160, %v158
    %v181 = vpack.c.b16 %v161, %v159
    %v182 = vpack.c.b16 %v164, %v162
    %v183 = vpack.c.b16 %v165, %v163
    %v184 = vpack.c.b16 %v168, %v166
    %v185 = vpack.c.b16 %v169, %v167
    %202 = vmatprep.subr.bf16.mxu0 %v171
    %203 = vmatpush1.bf16.msra.mxu0 %v170
    %204 = vmatprep.subr.bf16.mxu0 %v173
    %205 = vmatpush1.bf16.msra.mxu0 %v172
    %206 = vmatprep.subr.bf16.mxu0 %v175
    %207 = vmatpush1.bf16.msra.mxu0 %v174
    %208 = vmatprep.subr.bf16.mxu0 %v177
    %209 = vmatpush1.bf16.msra.mxu0 %v176
    %210 = vmatprep.subr.bf16.mxu0 %v179
    %211 = vmatpush1.bf16.msra.mxu0 %v178
    %212 = vmatprep.subr.bf16.mxu0 %v181
    %213 = vmatpush1.bf16.msra.mxu0 %v180
    %214 = vmatprep.subr.bf16.mxu0 %v183
    %215 = vmatpush1.bf16.msra.mxu0 %v182
    %216 = vmatprep.subr.bf16.mxu0 %v185
    %217 = vmatpush1.bf16.msra.mxu0 %v184
    %218 = vmatprep.subr.bf16.mxu0 0
    %219 = vmatpush1.bf16.msra.mxu0 0
    %220 = vmatprep.subr.bf16.mxu0 0
    %221 = vmatpush1.bf16.msra.mxu0 0
    %222 = vmatprep.subr.bf16.mxu0 0
    %223 = vmatpush1.bf16.msra.mxu0 0
    %224 = vmatprep.subr.bf16.mxu0 0
    %225 = vmatpush1.bf16.msra.mxu0 0
    %226 = vmatprep.subr.bf16.mxu0 0
    %227 = vmatpush1.bf16.msra.mxu0 0
    %228 = vmatprep.subr.bf16.mxu0 0
    %229 = vmatpush1.bf16.msra.mxu0 0
    %230 = vmatprep.subr.bf16.mxu0 0
    %231 = vmatpush1.bf16.msra.mxu0 0
    %232 = vmatprep.subr.bf16.mxu0 0
    %233 = vmatpush1.bf16.msra.mxu0 0
    %234 = vmatprep.mubr.bf16.mxu0 0
    %235 = vmatmul.mubr.bf16.gmra.mrb[0].mxu0 %v120
    %v236 = vpop.f32.mrb[0].mxu0
    %v237 = vadd.f32 %v109, %v236
    %v238 = vpop.f32.mrb[0].mxu0
    %v239 = vadd.f32 %v113, %v238
    %v240 = vpop.f32.mrb[0].mxu0
    %v241 = vadd.f32 %v109, %v240
    %v242 = vpop.f32.mrb[0].mxu0
    %v243 = vadd.f32 %v113, %v242
    %244 = vdwg.mxu0
    %v245 = vmax.f32 %v237, 0.0
    %v246 = vmax.f32 %v239, 0.0
    %v247 = vmax.f32 %v241, 0.0
    %v248 = vmax.f32 %v243, 0.0
    %v249 = vpack.c.bf16 %v247, %v245
    %v250 = vpack.c.bf16 %v248, %v246
    %v251 = vld [vmem:[#allocation7] sm:$0xf]
    %v252 = vld [vmem:[#allocation7 + $0x4] sm:$0xf]
    %v253 = vld [vmem:[#allocation7 + $0x8] sm:$0xf]
    %v254 = vld [vmem:[#allocation7 + $0xc] sm:$0xf]
    %v255 = vld [vmem:[#allocation7 + $0x10] sm:$0xf]
    %v256 = vld [vmem:[#allocation7 + $0x14] sm:$0xf]
    %v257 = vld [vmem:[#allocation7 + $0x18] sm:$0xf]
    %v258 = vld [vmem:[#allocation7 + $0x1c] sm:$0xf]
    %v259 = vld [vmem:[#allocation7 + $0x20] sm:$0xf]
    %v260 = vld [vmem:[#allocation7 + $0x24] sm:$0xf]
    %v261 = vld [vmem:[#allocation7 + $0x28] sm:$0xf]
    %v262 = vld [vmem:[#allocation7 + $0x2c] sm:$0xf]
    %v263 = vld [vmem:[#allocation7 + $0x30] sm:$0xf]
    %v264 = vld [vmem:[#allocation7 + $0x34] sm:$0xf]
    %v265 = vld [vmem:[#allocation7 + $0x38] sm:$0xf]
    %v266 = vld [vmem:[#allocation7 + $0x3c] sm:$0xf]
    %v267 = vld [vmem:[%s4] sm:$0x1]
    %v269 = vlaneseq
    %v270 = vshrl.u32 %v269, 7
    %v271 = vsub.s32 0, %v270
    %v272 = vrot.slane %v267, %v271
    %v290 = vunpack.c.l.b16 %v251
    %v291 = vunpack.c.l.b16 %v252
    %v292 = vunpack.c.l.b16 %v253
    %v293 = vunpack.c.l.b16 %v254
    %v294 = vunpack.c.l.b16 %v255
    %v295 = vunpack.c.l.b16 %v256
    %v296 = vunpack.c.l.b16 %v257
    %v297 = vunpack.c.l.b16 %v258
    %v298 = vunpack.c.l.b16 %v259
    %v299 = vunpack.c.l.b16 %v260
    %v300 = vunpack.c.l.b16 %v261
    %v301 = vunpack.c.l.b16 %v262
    %v302 = vunpack.c.l.b16 %v263
    %v303 = vunpack.c.l.b16 %v264
    %v304 = vunpack.c.l.b16 %v265
    %v305 = vunpack.c.l.b16 %v266
    %v306 = vpack.c.b16 %v291, %v290
    %v307 = vpack.c.b16 %v293, %v292
    %v308 = vpack.c.b16 %v295, %v294
    %v309 = vpack.c.b16 %v297, %v296
    %v310 = vpack.c.b16 %v299, %v298
    %v311 = vpack.c.b16 %v301, %v300
    %v312 = vpack.c.b16 %v303, %v302
    %v313 = vpack.c.b16 %v305, %v304
    %322 = vmatprep.subr.bf16.mxu0 0
    %323 = vmatpush1.bf16.msra.mxu0 %v306
    %324 = vmatprep.subr.bf16.mxu0 0
    %325 = vmatpush1.bf16.msra.mxu0 %v307
    %326 = vmatprep.subr.bf16.mxu0 0
    %327 = vmatpush1.bf16.msra.mxu0 %v308
    %328 = vmatprep.subr.bf16.mxu0 0
    %329 = vmatpush1.bf16.msra.mxu0 %v309
    %330 = vmatprep.subr.bf16.mxu0 0
    %331 = vmatpush1.bf16.msra.mxu0 %v310
    %332 = vmatprep.subr.bf16.mxu0 0
    %333 = vmatpush1.bf16.msra.mxu0 %v311
    %334 = vmatprep.subr.bf16.mxu0 0
    %335 = vmatpush1.bf16.msra.mxu0 %v312
    %336 = vmatprep.subr.bf16.mxu0 0
    %337 = vmatpush1.bf16.msra.mxu0 %v313
    %338 = vmatprep.subr.bf16.mxu0 0
    %339 = vmatpush1.bf16.msra.mxu0 0
    %340 = vmatprep.subr.bf16.mxu0 0
    %341 = vmatpush1.bf16.msra.mxu0 0
    %342 = vmatprep.subr.bf16.mxu0 0
    %343 = vmatpush1.bf16.msra.mxu0 0
    %344 = vmatprep.subr.bf16.mxu0 0
    %345 = vmatpush1.bf16.msra.mxu0 0
    %346 = vmatprep.subr.bf16.mxu0 0
    %347 = vmatpush1.bf16.msra.mxu0 0
    %348 = vmatprep.subr.bf16.mxu0 0
    %349 = vmatpush1.bf16.msra.mxu0 0
    %350 = vmatprep.subr.bf16.mxu0 0
    %351 = vmatpush1.bf16.msra.mxu0 0
    %352 = vmatprep.subr.bf16.mxu0 0
    %353 = vmatpush1.bf16.msra.mxu0 0
    %354 = vmatprep.mubr.bf16.mxu0 0
    %355 = vmatmul.mubr.bf16.gmra.mrb[0].mxu0 %v249
    %v356 = vpop.f32.mrb[0].mxu0
    %v357 = vadd.f32 %v272, %v356
    %v358 = vpop.f32.mrb[0].mxu0
    %v359 = vpop.f32.mrb[0].mxu0
    %v360 = vadd.f32 %v272, %v359
    %v361 = vpop.f32.mrb[0].mxu0
    %362 = vdwg.mxu0
    %v363 = vld [vmem:[#allocation8] sm:$0xf]
    %v364 = vld [vmem:[#allocation8 + $0x4] sm:$0xf]
    %v365 = vld [vmem:[#allocation8 + $0x8] sm:$0xf]
    %v366 = vld [vmem:[#allocation8 + $0xc] sm:$0xf]
    %v367 = vld [vmem:[#allocation8 + $0x10] sm:$0xf]
    %v368 = vld [vmem:[#allocation8 + $0x14] sm:$0xf]
    %v369 = vld [vmem:[#allocation8 + $0x18] sm:$0xf]
    %v370 = vld [vmem:[#allocation8 + $0x1c] sm:$0xf]
    %v371 = vld [vmem:[#allocation8 + $0x20] sm:$0xf]
    %v372 = vld [vmem:[#allocation8 + $0x24] sm:$0xf]
    %v373 = vld [vmem:[#allocation8 + $0x28] sm:$0xf]
    %v374 = vld [vmem:[#allocation8 + $0x2c] sm:$0xf]
    %v375 = vld [vmem:[#allocation8 + $0x30] sm:$0xf]
    %v376 = vld [vmem:[#allocation8 + $0x34] sm:$0xf]
    %v377 = vld [vmem:[#allocation8 + $0x38] sm:$0xf]
    %v378 = vld [vmem:[#allocation8 + $0x3c] sm:$0xf]
    %v379 = vld [vmem:[%s6] sm:$0x1]
    %v381 = vlaneseq
    %v382 = vshrl.u32 %v381, 7
    %v383 = vsub.s32 0, %v382
    %v384 = vrot.slane %v379, %v383
    %v402 = vunpack.c.l.b16 %v363
    %v403 = vunpack.c.l.b16 %v364
    %v404 = vunpack.c.l.b16 %v365
    %v405 = vunpack.c.l.b16 %v366
    %v406 = vunpack.c.l.b16 %v367
    %v407 = vunpack.c.l.b16 %v368
    %v408 = vunpack.c.l.b16 %v369
    %v409 = vunpack.c.l.b16 %v370
    %v410 = vunpack.c.l.b16 %v371
    %v411 = vunpack.c.l.b16 %v372
    %v412 = vunpack.c.l.b16 %v373
    %v413 = vunpack.c.l.b16 %v374
    %v414 = vunpack.c.l.b16 %v375
    %v415 = vunpack.c.l.b16 %v376
    %v416 = vunpack.c.l.b16 %v377
    %v417 = vunpack.c.l.b16 %v378
    %v418 = vpack.c.b16 %v403, %v402
    %v419 = vpack.c.b16 %v405, %v404
    %v420 = vpack.c.b16 %v407, %v406
    %v421 = vpack.c.b16 %v409, %v408
    %v422 = vpack.c.b16 %v411, %v410
    %v423 = vpack.c.b16 %v413, %v412
    %v424 = vpack.c.b16 %v415, %v414
    %v425 = vpack.c.b16 %v417, %v416
    %434 = vmatprep.subr.bf16.mxu0 0
    %435 = vmatpush1.bf16.msra.mxu0 %v418
    %436 = vmatprep.subr.bf16.mxu0 0
    %437 = vmatpush1.bf16.msra.mxu0 %v419
    %438 = vmatprep.subr.bf16.mxu0 0
    %439 = vmatpush1.bf16.msra.mxu0 %v420
    %440 = vmatprep.subr.bf16.mxu0 0
    %441 = vmatpush1.bf16.msra.mxu0 %v421
    %442 = vmatprep.subr.bf16.mxu0 0
    %443 = vmatpush1.bf16.msra.mxu0 %v422
    %444 = vmatprep.subr.bf16.mxu0 0
    %445 = vmatpush1.bf16.msra.mxu0 %v423
    %446 = vmatprep.subr.bf16.mxu0 0
    %447 = vmatpush1.bf16.msra.mxu0 %v424
    %448 = vmatprep.subr.bf16.mxu0 0
    %449 = vmatpush1.bf16.msra.mxu0 %v425
    %450 = vmatprep.subr.bf16.mxu0 0
    %451 = vmatpush1.bf16.msra.mxu0 0
    %452 = vmatprep.subr.bf16.mxu0 0
    %453 = vmatpush1.bf16.msra.mxu0 0
    %454 = vmatprep.subr.bf16.mxu0 0
    %455 = vmatpush1.bf16.msra.mxu0 0
    %456 = vmatprep.subr.bf16.mxu0 0
    %457 = vmatpush1.bf16.msra.mxu0 0
    %458 = vmatprep.subr.bf16.mxu0 0
    %459 = vmatpush1.bf16.msra.mxu0 0
    %460 = vmatprep.subr.bf16.mxu0 0
    %461 = vmatpush1.bf16.msra.mxu0 0
    %462 = vmatprep.subr.bf16.mxu0 0
    %463 = vmatpush1.bf16.msra.mxu0 0
    %464 = vmatprep.subr.bf16.mxu0 0
    %465 = vmatpush1.bf16.msra.mxu0 0
    %466 = vmatprep.mubr.bf16.mxu0 0
    %467 = vmatmul.mubr.bf16.gmra.mrb[0].mxu0 %v250
    %v468 = vpop.f32.mrb[0].mxu0
    %v469 = vadd.f32 %v384, %v468
    %v470 = vpop.f32.mrb[0].mxu0
    %v471 = vpop.f32.mrb[0].mxu0
    %v472 = vadd.f32 %v384, %v471
    %v473 = vpop.f32.mrb[0].mxu0
    %474 = vdwg.mxu0
    %475 = vst [vmem:[#allocation10] sm:$0xff] %v357
    %476 = vst [vmem:[#allocation10 + $0x8] sm:$0xff] %v360
    %477 = vst [vmem:[#allocation11] sm:$0xff] %v469
    %478 = vst [vmem:[#allocation11 + $0x8] sm:$0xff] %v472
    // Predicated region
    $region46: #{tpu_custom_call.1} parent=1 // pred_check
      _
    $region47: #{tpu_custom_call.1} parent=1 // pred_check_branch
      %480 = sbr.rel (0) target = $region49
    $region48: #{tpu_custom_call.1} parent=1 // pred_region
      %s482 = ssub.s32 256, 256
      %483 = vsyncadd [#allocation4], %s482
      %s484 = sshll.u32 [#allocation10], 4
      %s485 = int_to_ptr.vmem [resolvable:$true] %s484
      %490 = dma.vmem_to_hbm [thread:$0]  %s485, 256, %s7, [#allocation4], 128, 128, 8
    $region49: #{tpu_custom_call.1} parent=1 // pred_fallthru
      _
    // Predicated region
    $region50: #{tpu_custom_call.1} parent=1 // pred_check
      _
    $region51: #{tpu_custom_call.1} parent=1 // pred_check_branch
      %492 = sbr.rel (0) target = $region53
    $region52: #{tpu_custom_call.1} parent=1 // pred_region
      %s494 = ssub.s32 256, 256
      %495 = vsyncadd [#allocation12], %s494
      %s496 = sshll.u32 [#allocation11], 4
      %s497 = int_to_ptr.vmem [resolvable:$true] %s496
      %502 = dma.vmem_to_hbm [thread:$0]  %s497, 256, %s8, [#allocation12], 128, 128, 8
    $region53: #{tpu_custom_call.1} parent=1 // pred_fallthru
      _
    // Predicated region
    $region54: #{tpu_custom_call.1} parent=1 // pred_check
      _
    $region55: #{tpu_custom_call.1} parent=1 // pred_check_branch
      %504 = sbr.rel (0) target = $region57
    $region56: #{tpu_custom_call.1} parent=1 // pred_region
      %505 = dma.done [#allocation4], 256
    $region57: #{tpu_custom_call.1} parent=1 // pred_fallthru
      _
    // Predicated region
    $region58: #{tpu_custom_call.1} parent=1 // pred_check
      _
    $region59: #{tpu_custom_call.1} parent=1 // pred_check_branch
      %507 = sbr.rel (0) target = $region61
    $region60: #{tpu_custom_call.1} parent=1 // pred_region
      %508 = dma.done [#allocation12], 256
    $region61: #{tpu_custom_call.1} parent=1 // pred_fallthru
      _
    %509 = vsyncpa [#allocation3], 1
    %510 = vsyncpa [#allocation6], 1
    %511 = vsyncpa [#allocation9], 1
    %512 = vsyncpa [#allocation4], 1
    %513 = vsyncpa [#allocation12], 1

</llo_original>
